<compile_context>
chip_gen: v7x
topology: tpu7x:2x2x1
jax: 0.10.0
libtpu: 0.0.40
codegen_flags: <defaults>
</compile_context>

<pallas_src>
import functools
import math

import jax
import jax.numpy as jnp
from jax.experimental import pallas as pl
from jax.experimental.pallas import tpu as pltpu


def _upsample_kernel(x_ref, w_ref, shift_ref, even_ref, odd_ref, *, stk_pnt: int):
    """One (batch, stroke-block) tile.

    x_ref:     (TB, Ci)   f32, TB = strokes_per_block * stk_pnt
    w_ref:     (4, Ci, Co) f32, BN-scale already folded in
    shift_ref: (1, Co)    f32, conv-bias + BN shift folded
    even_ref:  (TB, Co)   f32  -> output points 2p
    odd_ref:   (TB, Co)   f32  -> output points 2p+1
    """
    x = x_ref[...]                                            # (TB, Ci)
    tb, ci = x.shape

    # Neighbour points within each stroke (zero across stroke boundaries).
    zero_row = jnp.zeros((1, ci), dtype=x.dtype)
    x_prev = jnp.concatenate([zero_row, x[:-1, :]], axis=0)   # x[p-1]
    x_next = jnp.concatenate([x[1:, :], zero_row], axis=0)    # x[p+1]

    row = jax.lax.broadcasted_iota(jnp.int32, (tb, 1), 0)
    p_loc = row % stk_pnt
    x_prev = jnp.where(p_loc != 0, x_prev, 0.0)               # stroke start
    x_next = jnp.where(p_loc != (stk_pnt - 1), x_next, 0.0)   # stroke end

    w0 = w_ref[0]
    w1 = w_ref[1]
    w2 = w_ref[2]
    w3 = w_ref[3]
    shift = shift_ref[...]                                    # (1, Co)

    even = (jnp.dot(x, w1, preferred_element_type=jnp.float32)
            + jnp.dot(x_prev, w3, preferred_element_type=jnp.float32)
            + shift)
    odd = (jnp.dot(x_next, w0, preferred_element_type=jnp.float32)
           + jnp.dot(x, w2, preferred_element_type=jnp.float32)
           + shift)

    # LeakyReLU(0.2)
    even_ref[...] = jnp.where(even >= 0, even, 0.2 * even).astype(even_ref.dtype)
    odd_ref[...] = jnp.where(odd >= 0, odd, 0.2 * odd).astype(odd_ref.dtype)


def upsample_forward(dense_fea, weight, bias, gamma, beta, running_mean,
                     running_var, *, n_stk, n_stk_pnt, eps=1e-5,
                     stroke_tile=None):
    """UpSample.forward (eval mode).

    dense_fea: [bs, Ci, n_pnt] with n_pnt = n_stk * n_stk_pnt
    weight:    [Ci, Co, 1, 4]  (PyTorch ConvTranspose2d layout)
    bias, gamma, beta, running_mean, running_var: [Co]
    returns:   [bs, Co, 2 * n_pnt]
    """
    bs, ci, n_pnt = dense_fea.shape
    assert n_pnt == n_stk * n_stk_pnt
    co = weight.shape[1]

    # --- Fold conv bias + BatchNorm (eval) into weights / shift (hoisted). ---
    scale = gamma / jnp.sqrt(running_var + eps)                       # (Co,)
    w_folded = weight[:, :, 0, :] * scale[None, :, None]              # (Ci, Co, 4)
    w_stack = jnp.transpose(w_folded, (2, 0, 1)).astype(jnp.float32)  # (4, Ci, Co)
    shift = (beta + scale * (bias - running_mean)).reshape(1, co).astype(jnp.float32)

    # Points on sublanes, channels on lanes (no lane-width-1 tiles).
    x_t = jnp.transpose(dense_fea, (0, 2, 1)).astype(jnp.float32)     # (bs, N, Ci)

    # --- Tiling over (batch, stroke blocks). ---
    if stroke_tile is None:
        stroke_tile = n_stk
    assert n_stk % stroke_tile == 0
    tb = stroke_tile * n_stk_pnt                                      # rows per block
    assert tb == n_pnt or tb % 8 == 0, "stroke tile must be sublane aligned"
    n_blk = n_pnt // tb

    kernel = functools.partial(_upsample_kernel, stk_pnt=n_stk_pnt)

    even, odd = pl.pallas_call(
        kernel,
        out_shape=(jax.ShapeDtypeStruct((bs, n_pnt, co), jnp.float32),
                   jax.ShapeDtypeStruct((bs, n_pnt, co), jnp.float32)),
        grid=(bs, n_blk),
        in_specs=[
            pl.BlockSpec((None, tb, ci), lambda b, j: (b, j, 0)),     # activations
            pl.BlockSpec((4, ci, co), lambda b, j: (0, 0, 0)),        # weights (resident)
            pl.BlockSpec((1, co), lambda b, j: (0, 0)),               # per-channel shift
        ],
        out_specs=(
            pl.BlockSpec((None, tb, co), lambda b, j: (b, j, 0)),
            pl.BlockSpec((None, tb, co), lambda b, j: (b, j, 0)),
        ),
        compiler_params=pltpu.CompilerParams(
            dimension_semantics=("parallel", "parallel")),
    )(x_t, w_stack, shift)

    # --- Interleave even/odd points and restore [bs, Co, 2*n_pnt] layout. ---
    even_r = even.reshape(bs, n_stk, n_stk_pnt, co)
    odd_r = odd.reshape(bs, n_stk, n_stk_pnt, co)
    out = jnp.stack([even_r, odd_r], axis=3)                 # (bs, S, P, 2, Co)
    out = out.reshape(bs, n_stk, 2 * n_stk_pnt, co)          # width = 2p + parity
    out = jnp.transpose(out, (0, 3, 1, 2)).reshape(bs, co, 2 * n_pnt)
    return out


def _reference(dense_fea, weight, bias, gamma, beta, mean, var, *,
               n_stk, n_stk_pnt, eps=1e-5):
    """Pure-JAX reference: lhs-dilated conv == ConvTranspose2d, then BN (eval),
    LeakyReLU(0.2); Dropout2d is identity in eval mode."""
    bs, ci, n_pnt = dense_fea.shape
    co = weight.shape[1]
    x4 = dense_fea.reshape(bs, ci, n_stk, n_stk_pnt).astype(jnp.float32)
    # ConvTranspose(K=(1,4), s=(1,2), p=(0,1)) == dilated conv with flipped,
    # channel-transposed kernel and padding (K-1-p) = (0, 2).
    w_conv = jnp.flip(weight, axis=(2, 3)).transpose(1, 0, 2, 3)      # (Co, Ci, 1, 4)
    y = jax.lax.conv_general_dilated(
        x4, w_conv.astype(jnp.float32),
        window_strides=(1, 1),
        padding=((0, 0), (2, 2)),
        lhs_dilation=(1, 2),
        rhs_dilation=(1, 1),
        dimension_numbers=("NCHW", "OIHW", "NCHW"),
        precision=jax.lax.Precision.HIGHEST)
    y = y + bias.reshape(1, co, 1, 1)
    y = (y - mean.reshape(1, co, 1, 1)) / jnp.sqrt(
        var.reshape(1, co, 1, 1) + eps) * gamma.reshape(1, co, 1, 1) \
        + beta.reshape(1, co, 1, 1)
    y = jnp.where(y >= 0, y, 0.2 * y)
    return y.reshape(bs, co, n_stk * n_stk_pnt * 2)


if __name__ == "__main__":
    key = jax.random.PRNGKey(0)
    k_x, k_w, k_b, k_g, k_bt, k_m, k_v = jax.random.split(key, 7)

    bs, dim_in, dim_out = 2, 32, 64
    n_stk, n_stk_pnt = 4, 8
    n_pnt = n_stk * n_stk_pnt

    dense_fea = jax.random.normal(k_x, (bs, dim_in, n_pnt), dtype=jnp.float32)
    weight = jax.random.normal(k_w, (dim_in, dim_out, 1, 4),
                               dtype=jnp.float32) / math.sqrt(dim_in * 4)
    bias = 0.1 * jax.random.normal(k_b, (dim_out,), dtype=jnp.float32)
    gamma = jax.random.uniform(k_g, (dim_out,), dtype=jnp.float32,
                               minval=0.5, maxval=1.5)
    beta = 0.1 * jax.random.normal(k_bt, (dim_out,), dtype=jnp.float32)
    running_mean = 0.1 * jax.random.normal(k_m, (dim_out,), dtype=jnp.float32)
    running_var = jax.random.uniform(k_v, (dim_out,), dtype=jnp.float32,
                                     minval=0.5, maxval=1.5)

    out = upsample_forward(dense_fea, weight, bias, gamma, beta,
                           running_mean, running_var,
                           n_stk=n_stk, n_stk_pnt=n_stk_pnt)
    out = jax.block_until_ready(out)

    ref = _reference(dense_fea, weight, bias, gamma, beta,
                     running_mean, running_var,
                     n_stk=n_stk, n_stk_pnt=n_stk_pnt)
    ref = jax.block_until_ready(ref)

    assert out.shape == (bs, dim_out, 2 * n_pnt), out.shape
    assert jnp.allclose(out, ref, atol=2e-3, rtol=2e-3), (
        "mismatch vs reference, max abs err = "
        f"{float(jnp.max(jnp.abs(out - ref)))}")

    print("KERNEL_OK")
</pallas_src>

<mosaic_0001>
module attributes {stable_mosaic.version = 11 : i64} {
  func.func @_upsample_kernel(%arg0: i32, %arg1: i32, %arg2: memref<1x32x32xf32, #tpu.memory_space<vmem>>, %arg3: memref<4x32x64xf32, #tpu.memory_space<vmem>>, %arg4: memref<1x64xf32, #tpu.memory_space<vmem>>, %arg5: memref<1x32x64xf32, #tpu.memory_space<vmem>>, %arg6: memref<1x32x64xf32, #tpu.memory_space<vmem>>) attributes {dimension_semantics = [#tpu.dimension_semantics<parallel>, #tpu.dimension_semantics<parallel>], iteration_bounds = array<i64: 2, 1>, scalar_prefetch = 0 : i64, scratch_operands = 0 : i64, tpu.core_type = #tpu.core_type<tc>, window_params = [{transform_indices = @transform_0, window_bounds = array<i64: 1, 32, 32>}, {pipeline_mode = #tpu.pipeline_mode<synchronous>, transform_indices = @transform_1, window_bounds = array<i64: 4, 32, 64>}, {pipeline_mode = #tpu.pipeline_mode<synchronous>, transform_indices = @transform_2, window_bounds = array<i64: 1, 64>}, {transform_indices = @transform_3, window_bounds = array<i64: 1, 32, 64>}, {transform_indices = @transform_4, window_bounds = array<i64: 1, 32, 64>}]} {
    %c0 = arith.constant 0 : index
    %c0_0 = arith.constant 0 : index
    %c0_1 = arith.constant 0 : index
    %0 = vector.load %arg2[%c0, %c0_0, %c0_1] : memref<1x32x32xf32, #tpu.memory_space<vmem>>, vector<1x32x32xf32>
    %1 = vector.shape_cast %0 : vector<1x32x32xf32> to vector<32x32xf32>
    %cst = arith.constant 0.000000e+00 : f32
    %2 = vector.broadcast %cst : f32 to vector<1x32xf32>
    %3 = vector.extract_strided_slice %1 {offsets = [0, 0], sizes = [31, 32], strides = [1, 1]} : vector<32x32xf32> to vector<31x32xf32>
    %4 = tpu.concatenate %2, %3 in 0 : vector<1x32xf32>, vector<31x32xf32> -> vector<32x32xf32>
    %5 = vector.extract_strided_slice %1 {offsets = [1, 0], sizes = [31, 32], strides = [1, 1]} : vector<32x32xf32> to vector<31x32xf32>
    %6 = tpu.concatenate %5, %2 in 0 : vector<31x32xf32>, vector<1x32xf32> -> vector<32x32xf32>
    %7 = tpu.iota {dimensions = array<i32: 0>} : vector<32x1xi32>
    %c8_i32 = arith.constant 8 : i32
    %c0_i32 = arith.constant 0 : i32
    %8 = arith.cmpi eq, %c8_i32, %c0_i32 : i32
    %c1_i32 = arith.constant 1 : i32
    %9 = arith.select %8, %c1_i32, %c8_i32 : i32
    %10 = vector.broadcast %9 : i32 to vector<32x1xi32>
    %11 = arith.remsi %7, %10 : vector<32x1xi32>
    %c0_i32_2 = arith.constant 0 : i32
    %12 = vector.broadcast %c0_i32_2 : i32 to vector<32x1xi32>
    %13 = arith.cmpi ne, %11, %12 : vector<32x1xi32>
    %c0_i32_3 = arith.constant 0 : i32
    %14 = vector.broadcast %c0_i32_3 : i32 to vector<32x1xi32>
    %15 = arith.cmpi slt, %11, %14 : vector<32x1xi32>
    %c0_i32_4 = arith.constant 0 : i32
    %16 = arith.cmpi slt, %9, %c0_i32_4 : i32
    %17 = vector.broadcast %16 : i1 to vector<32x1xi1>
    %18 = vector.broadcast %17 : vector<32x1xi1> to vector<32x1xi1>
    %19 = arith.xori %15, %18 : vector<32x1xi1>
    %20 = arith.andi %19, %13 : vector<32x1xi1>
    %21 = vector.broadcast %9 : i32 to vector<32x1xi32>
    %22 = arith.addi %11, %21 : vector<32x1xi32>
    %23 = arith.select %20, %22, %11 : vector<32x1xi1>, vector<32x1xi32>
    %c0_i32_5 = arith.constant 0 : i32
    %24 = vector.broadcast %c0_i32_5 : i32 to vector<32x1xi32>
    %25 = arith.cmpi ne, %23, %24 : vector<32x1xi32>
    %cst_6 = arith.constant 0.000000e+00 : f32
    %26 = vector.shape_cast %25 : vector<32x1xi1> to vector<32x1xi1>
    %27 = vector.broadcast %26 : vector<32x1xi1> to vector<32x32xi1>
    %28 = vector.broadcast %cst_6 : f32 to vector<32x32xf32>
    %29 = arith.select %27, %4, %28 : vector<32x32xi1>, vector<32x32xf32>
    %c7_i32 = arith.constant 7 : i32
    %30 = vector.broadcast %c7_i32 : i32 to vector<32x1xi32>
    %31 = arith.cmpi ne, %23, %30 : vector<32x1xi32>
    %cst_7 = arith.constant 0.000000e+00 : f32
    %32 = vector.shape_cast %31 : vector<32x1xi1> to vector<32x1xi1>
    %33 = vector.broadcast %32 : vector<32x1xi1> to vector<32x32xi1>
    %34 = vector.broadcast %cst_7 : f32 to vector<32x32xf32>
    %35 = arith.select %33, %6, %34 : vector<32x32xi1>, vector<32x32xf32>
    %c0_8 = arith.constant 0 : index
    %c0_9 = arith.constant 0 : index
    %c0_10 = arith.constant 0 : index
    %36 = vector.load %arg3[%c0_8, %c0_9, %c0_10] : memref<4x32x64xf32, #tpu.memory_space<vmem>>, vector<1x32x64xf32>
    %37 = vector.shape_cast %36 : vector<1x32x64xf32> to vector<32x64xf32>
    %c1 = arith.constant 1 : index
    %c0_11 = arith.constant 0 : index
    %c0_12 = arith.constant 0 : index
    %38 = vector.load %arg3[%c1, %c0_11, %c0_12] : memref<4x32x64xf32, #tpu.memory_space<vmem>>, vector<1x32x64xf32>
    %39 = vector.shape_cast %38 : vector<1x32x64xf32> to vector<32x64xf32>
    %c2 = arith.constant 2 : index
    %c0_13 = arith.constant 0 : index
    %c0_14 = arith.constant 0 : index
    %40 = vector.load %arg3[%c2, %c0_13, %c0_14] : memref<4x32x64xf32, #tpu.memory_space<vmem>>, vector<1x32x64xf32>
    %41 = vector.shape_cast %40 : vector<1x32x64xf32> to vector<32x64xf32>
    %c3 = arith.constant 3 : index
    %c0_15 = arith.constant 0 : index
    %c0_16 = arith.constant 0 : index
    %42 = vector.load %arg3[%c3, %c0_15, %c0_16] : memref<4x32x64xf32, #tpu.memory_space<vmem>>, vector<1x32x64xf32>
    %43 = vector.shape_cast %42 : vector<1x32x64xf32> to vector<32x64xf32>
    %c0_17 = arith.constant 0 : index
    %c0_18 = arith.constant 0 : index
    %44 = vector.load %arg4[%c0_17, %c0_18] : memref<1x64xf32, #tpu.memory_space<vmem>>, vector<1x64xf32>
    %cst_19 = arith.constant dense<0.000000e+00> : vector<32x64xf32>
    %45 = tpu.matmul %1, %39, %cst_19 {dimension_numbers = #tpu.dot_dimension_numbers<[1], [0], [0], [1], [0, 0, 1, 1], [], []>} : vector<32x32xf32>, vector<32x64xf32>, vector<32x64xf32> -> vector<32x64xf32>
    %cst_20 = arith.constant dense<0.000000e+00> : vector<32x64xf32>
    %46 = tpu.matmul %29, %43, %cst_20 {dimension_numbers = #tpu.dot_dimension_numbers<[1], [0], [0], [1], [0, 0, 1, 1], [], []>} : vector<32x32xf32>, vector<32x64xf32>, vector<32x64xf32> -> vector<32x64xf32>
    %47 = arith.addf %45, %46 : vector<32x64xf32>
    %48 = vector.broadcast %44 : vector<1x64xf32> to vector<32x64xf32>
    %49 = arith.addf %47, %48 : vector<32x64xf32>
    %cst_21 = arith.constant dense<0.000000e+00> : vector<32x64xf32>
    %50 = tpu.matmul %35, %37, %cst_21 {dimension_numbers = #tpu.dot_dimension_numbers<[1], [0], [0], [1], [0, 0, 1, 1], [], []>} : vector<32x32xf32>, vector<32x64xf32>, vector<32x64xf32> -> vector<32x64xf32>
    %cst_22 = arith.constant dense<0.000000e+00> : vector<32x64xf32>
    %51 = tpu.matmul %1, %41, %cst_22 {dimension_numbers = #tpu.dot_dimension_numbers<[1], [0], [0], [1], [0, 0, 1, 1], [], []>} : vector<32x32xf32>, vector<32x64xf32>, vector<32x64xf32> -> vector<32x64xf32>
    %52 = arith.addf %50, %51 : vector<32x64xf32>
    %53 = vector.broadcast %44 : vector<1x64xf32> to vector<32x64xf32>
    %54 = arith.addf %52, %53 : vector<32x64xf32>
    %cst_23 = arith.constant 0.000000e+00 : f32
    %55 = vector.broadcast %cst_23 : f32 to vector<32x64xf32>
    %56 = arith.cmpf oge, %49, %55 : vector<32x64xf32>
    %cst_24 = arith.constant 2.000000e-01 : f32
    %57 = vector.broadcast %cst_24 : f32 to vector<32x64xf32>
    %58 = arith.mulf %57, %49 : vector<32x64xf32>
    %59 = arith.select %56, %49, %58 : vector<32x64xi1>, vector<32x64xf32>
    %c0_25 = arith.constant 0 : index
    %c0_26 = arith.constant 0 : index
    %c0_27 = arith.constant 0 : index
    %60 = vector.load %arg5[%c0_25, %c0_26, %c0_27] : memref<1x32x64xf32, #tpu.memory_space<vmem>>, vector<1x32x64xf32>
    %61 = vector.shape_cast %60 : vector<1x32x64xf32> to vector<32x64xf32>
    %62 = vector.shape_cast %59 : vector<32x64xf32> to vector<1x32x64xf32>
    tpu.vector_store %arg5[%c0_25, %c0_26, %c0_27], %62 {strides = array<i32>} : memref<1x32x64xf32, #tpu.memory_space<vmem>>, vector<1x32x64xf32>,
    %cst_28 = arith.constant 0.000000e+00 : f32
    %63 = vector.broadcast %cst_28 : f32 to vector<32x64xf32>
    %64 = arith.cmpf oge, %54, %63 : vector<32x64xf32>
    %cst_29 = arith.constant 2.000000e-01 : f32
    %65 = vector.broadcast %cst_29 : f32 to vector<32x64xf32>
    %66 = arith.mulf %65, %54 : vector<32x64xf32>
    %67 = arith.select %64, %54, %66 : vector<32x64xi1>, vector<32x64xf32>
    %c0_30 = arith.constant 0 : index
    %c0_31 = arith.constant 0 : index
    %c0_32 = arith.constant 0 : index
    %68 = vector.load %arg6[%c0_30, %c0_31, %c0_32] : memref<1x32x64xf32, #tpu.memory_space<vmem>>, vector<1x32x64xf32>
    %69 = vector.shape_cast %68 : vector<1x32x64xf32> to vector<32x64xf32>
    %70 = vector.shape_cast %67 : vector<32x64xf32> to vector<1x32x64xf32>
    tpu.vector_store %arg6[%c0_30, %c0_31, %c0_32], %70 {strides = array<i32>} : memref<1x32x64xf32, #tpu.memory_space<vmem>>, vector<1x32x64xf32>,
    return
  }
  func.func @transform_0(%arg0: i32, %arg1: i32) -> (i32, i32, i32) {
    %c0_i32 = arith.constant 0 : i32
    %c0_i32_0 = arith.constant 0 : i32
    return %arg0, %arg1, %c0_i32 : i32, i32, i32
  }
  func.func @transform_1(%arg0: i32, %arg1: i32) -> (i32, i32, i32) {
    %c0_i32 = arith.constant 0 : i32
    %c0_i32_0 = arith.constant 0 : i32
    %c0_i32_1 = arith.constant 0 : i32
    %c0_i32_2 = arith.constant 0 : i32
    return %c0_i32, %c0_i32_0, %c0_i32_1 : i32, i32, i32
  }
  func.func @transform_2(%arg0: i32, %arg1: i32) -> (i32, i32) {
    %c0_i32 = arith.constant 0 : i32
    %c0_i32_0 = arith.constant 0 : i32
    %c0_i32_1 = arith.constant 0 : i32
    return %c0_i32, %c0_i32_0 : i32, i32
  }
  func.func @transform_3(%arg0: i32, %arg1: i32) -> (i32, i32, i32) {
    %c0_i32 = arith.constant 0 : i32
    %c0_i32_0 = arith.constant 0 : i32
    return %arg0, %arg1, %c0_i32 : i32, i32, i32
  }
  func.func @transform_4(%arg0: i32, %arg1: i32) -> (i32, i32, i32) {
    %c0_i32 = arith.constant 0 : i32
    %c0_i32_0 = arith.constant 0 : i32
    return %arg0, %arg1, %c0_i32 : i32, i32, i32
  }
}

</mosaic_0001>

<llo_original>
// kernel: tpu_custom_call.1
$region0: #{tpu_custom_call.1}
  #allocation0 [shape = 'u32[]', space=smem, size = 0x4, offset = 0x4, fixed_abs, tag = 'smem constant byte address 0x4 - core index']
  #allocation1 [shape = 'u32[144,128]{1,0:T(1,128)}', space=vmem, size = 0x12000, scoped, tag = 'internal scratch']
  %s0 = inlined_call_operand.hbm [shape: f32[2,32,32], index: 0, kind: input, shape index: {}]
  %s1 = inlined_call_operand.hbm [shape: f32[4,32,64], index: 1, kind: input, shape index: {}]
  %s2 = inlined_call_operand.vmem [shape: f32[1,64], index: 2, kind: input, shape index: {}]
  %s3 = inlined_call_operand.hbm [shape: f32[2,32,64], index: 3, kind: output, shape index: {0}]
  %s4 = inlined_call_operand.hbm [shape: f32[2,32,64], index: 4, kind: output, shape index: {1}]
  %5 = xla_tuple %s3, %s4
  %s6 = sld [smem:[#allocation0]]
  $region61: #{tpu_custom_call.1} parent=0
    _
  %s8 = ssub.s32 1, %s6
  %s9 = scalar_select 0, %s8, %s6
  $region1: #{tpu_custom_call.1} parent=0
    #allocation2 [shape = 'u8[32768]{0}', space=vmem, size = 0x8000, scoped, tag = 'input window, operand 0']
    #allocation3 [shape = 's32[2]{0}', space=sflag, size = 0x8, scoped, tag = 'scoped memory for tpu_custom_call.1']
    #allocation4 [shape = 's32[2]{0}', space=sflag, size = 0x8, scoped, tag = 'scoped memory for tpu_custom_call.1']
    #allocation5 [shape = 'u8[65536]{0}', space=vmem, size = 0x10000, scoped, tag = 'input window, operand 1, single buffered']
    #allocation6 [shape = 's32[1]{0}', space=sflag, size = 0x4, scoped, tag = 'scoped memory for tpu_custom_call.1']
    #allocation7 [shape = 'u8[32768]{0}', space=vmem, size = 0x8000, scoped, tag = 'output window, operand 0']
    #allocation8 [shape = 'u8[32768]{0}', space=vmem, size = 0x8000, scoped, tag = 'output window, operand 1']
    #allocation9 [shape = 's32[2]{0}', space=sflag, size = 0x8, scoped, tag = 'scoped memory for tpu_custom_call.1']
    %10 = vsyncpa [#allocation3], 0
    %s11 = scalar_lea.sflag [#allocation3], 1
    %12 = vsyncpa %s11, 0
    %13 = vsyncpa [#allocation6], 0
    %14 = vsyncpa [#allocation4], 0
    %s15 = scalar_lea.sflag [#allocation4], 1
    %16 = vsyncpa %s15, 0
    %17 = vsyncpa [#allocation9], 0
    %s18 = scalar_lea.sflag [#allocation9], 1
    %19 = vsyncpa %s18, 0
    loop: start=0, step=1, limit=4
    $region2: #{tpu_custom_call.1} parent=1 // loop_pre_header
      _
    $region3: #{tpu_custom_call.1} parent=1 // loop_header
      %s21 = sphi 0, %s25
      %p22 = scmp.ge.s32.totalorder %s21, 4
      %s28 = sphi 0, %s40
      %s29 = sphi 0, %s36
      %s30 = sphi 0, %s28
      %s31 = sphi 0, %s29
      %s32 = sphi 0, %s30
      %s33 = sphi 0, %s31
      %s45 = sphi 0, %s47
      %s48 = sphi 0, %s45
      %s49 = sphi 0, %s48
      %s65 = sphi 0, %s49
      %s69 = sphi 0, %s69
      %s71 = sphi 0, %s69
      %s72 = sphi 0, %s71
      %s86 = sphi 0, %s72
      %s90 = sphi 0, %s90
      %s92 = sphi 0, %s90
      %s93 = sphi 0, %s92
      %s107 = sphi 0, %s93
      %s115 = sphi 0, %s117
      %s118 = sphi 0, %s115
      %s119 = sphi 0, %s118
      %s135 = sphi 0, %s119
      %s143 = sphi 0, %s145
      %s146 = sphi 0, %s143
      %s147 = sphi 0, %s146
      %s163 = sphi 0, %s147
    $region4: #{tpu_custom_call.1} parent=1 // loop_header_branch
      %24 = sbr.rel (%p22) target = $region8
    $region5: #{tpu_custom_call.1} parent=1 // loop_body
      %s26 = ssub.s32 %s21, 1
      %s27 = ssub.s32 %s21, 2
      %s34 = sadd.s32 1, %s29
      %p35 = scmp.ge.s32.totalorder %s34, 1
      %s36 = scalar_select %p35, 0, %s34
      %s37 = sadd.s32 1, %s28
      %s38 = scalar_select %p35, %s37, %s28
      %p39 = scmp.ge.s32.totalorder %s38, 2
      %s40 = scalar_select %p39, 0, %s38
      %s41 = ssub.s32 %s28, %s40
      %s42 = ssub.s32 %s29, %s36
      %s43 = sor.u32 %s41, %s42
      %p44 = scmp.eq.s32.totalorder %s43, 0
      %s46 = sadd.s32 %s45, 1
      %s47 = scalar_select %p44, %s45, %s46
      %p50 = pneg %p44
      %p51 = scmp.eq.s32.totalorder %s21, 1
      %p52 = por %p50, %p51
      %p53 = scmp.ne.s32.totalorder %s45, %s48
      %p54 = scmp.eq.s32.totalorder %s21, 0
      %p55 = por %p53, %p54
      %p56 = scmp.ne.s32.totalorder %s45, %s48
      %p57 = scmp.eq.s32.totalorder %s26, 1
      %p58 = por %p56, %p57
      %p59 = scmp.ne.s32.totalorder %s48, %s49
      %p60 = scmp.eq.s32.totalorder %s26, 0
      %p61 = por %p59, %p60
      %p62 = scmp.ne.s32.totalorder %s48, %s49
      %p63 = scmp.eq.s32.totalorder %s27, 1
      %p64 = por %p62, %p63
      %p66 = scmp.ne.s32.totalorder %s49, %s65
      %p67 = scmp.eq.s32.totalorder %s27, 0
      %p68 = por %p66, %p67
      %s70 = sadd.s32 %s69, 1
      %p73 = scmp.eq.s32.totalorder %s21, 1
      %p74 = scmp.ne.s32.totalorder %s69, %s71
      %p75 = scmp.eq.s32.totalorder %s21, 0
      %p76 = por %p74, %p75
      %p77 = scmp.ne.s32.totalorder %s69, %s71
      %p78 = scmp.eq.s32.totalorder %s26, 1
      %p79 = por %p77, %p78
      %p80 = scmp.ne.s32.totalorder %s71, %s72
      %p81 = scmp.eq.s32.totalorder %s26, 0
      %p82 = por %p80, %p81
      %p83 = scmp.ne.s32.totalorder %s71, %s72
      %p84 = scmp.eq.s32.totalorder %s27, 1
      %p85 = por %p83, %p84
      %p87 = scmp.ne.s32.totalorder %s72, %s86
      %p88 = scmp.eq.s32.totalorder %s27, 0
      %p89 = por %p87, %p88
      %s91 = sadd.s32 %s90, 1
      %p94 = scmp.eq.s32.totalorder %s21, 1
      %p95 = scmp.ne.s32.totalorder %s90, %s92
      %p96 = scmp.eq.s32.totalorder %s21, 0
      %p97 = por %p95, %p96
      %p98 = scmp.ne.s32.totalorder %s90, %s92
      %p99 = scmp.eq.s32.totalorder %s26, 1
      %p100 = por %p98, %p99
      %p101 = scmp.ne.s32.totalorder %s92, %s93
      %p102 = scmp.eq.s32.totalorder %s26, 0
      %p103 = por %p101, %p102
      %p104 = scmp.ne.s32.totalorder %s92, %s93
      %p105 = scmp.eq.s32.totalorder %s27, 1
      %p106 = por %p104, %p105
      %p108 = scmp.ne.s32.totalorder %s93, %s107
      %p109 = scmp.eq.s32.totalorder %s27, 0
      %p110 = por %p108, %p109
      %s111 = ssub.s32 %s28, %s40
      %s112 = ssub.s32 %s29, %s36
      %s113 = sor.u32 %s111, %s112
      %p114 = scmp.eq.s32.totalorder %s113, 0
      %s116 = sadd.s32 %s115, 1
      %s117 = scalar_select %p114, %s115, %s116
      %p120 = pneg %p114
      %p121 = scmp.eq.s32.totalorder %s21, 1
      %p122 = por %p120, %p121
      %p123 = scmp.ne.s32.totalorder %s115, %s118
      %p124 = scmp.eq.s32.totalorder %s21, 0
      %p125 = por %p123, %p124
      %p126 = scmp.ne.s32.totalorder %s115, %s118
      %p127 = scmp.eq.s32.totalorder %s26, 1
      %p128 = por %p126, %p127
      %p129 = scmp.ne.s32.totalorder %s118, %s119
      %p130 = scmp.eq.s32.totalorder %s26, 0
      %p131 = por %p129, %p130
      %p132 = scmp.ne.s32.totalorder %s118, %s119
      %p133 = scmp.eq.s32.totalorder %s27, 1
      %p134 = por %p132, %p133
      %p136 = scmp.ne.s32.totalorder %s119, %s135
      %p137 = scmp.eq.s32.totalorder %s27, 0
      %p138 = por %p136, %p137
      %s139 = ssub.s32 %s28, %s40
      %s140 = ssub.s32 %s29, %s36
      %s141 = sor.u32 %s139, %s140
      %p142 = scmp.eq.s32.totalorder %s141, 0
      %s144 = sadd.s32 %s143, 1
      %s145 = scalar_select %p142, %s143, %s144
      %p148 = pneg %p142
      %p149 = scmp.eq.s32.totalorder %s21, 1
      %p150 = por %p148, %p149
      %p151 = scmp.ne.s32.totalorder %s143, %s146
      %p152 = scmp.eq.s32.totalorder %s21, 0
      %p153 = por %p151, %p152
      %p154 = scmp.ne.s32.totalorder %s143, %s146
      %p155 = scmp.eq.s32.totalorder %s26, 1
      %p156 = por %p154, %p155
      %p157 = scmp.ne.s32.totalorder %s146, %s147
      %p158 = scmp.eq.s32.totalorder %s26, 0
      %p159 = por %p157, %p158
      %p160 = scmp.ne.s32.totalorder %s146, %s147
      %p161 = scmp.eq.s32.totalorder %s27, 1
      %p162 = por %p160, %p161
      %p164 = scmp.ne.s32.totalorder %s147, %s163
      %p165 = scmp.eq.s32.totalorder %s27, 0
      %p166 = por %p164, %p165
      %p167 = scmp.le.s32.totalorder 1, %s21
      %p168 = scmp.lt.s32.totalorder %s21, 3
      %p169 = pnand %p167, %p168
      %p170 = pneg %p169
      // Predicated region
      $region9: #{tpu_custom_call.1} parent=5 // pred_check
        _
      $region10: #{tpu_custom_call.1} parent=5 // pred_check_branch
        %172 = sbr.rel (%p169) target = $region12
      $region11: #{tpu_custom_call.1} parent=5 // pred_region
        %s173 = ssub.s32 %s21, 1
        // Predicated region
        $region13: #{tpu_custom_call.1} parent=11 // pred_check
          %p174 = pneg %p82
        $region14: #{tpu_custom_call.1} parent=11 // pred_check_branch
          %176 = sbr.rel (%p174) target = $region16
        $region15: #{tpu_custom_call.1} parent=11 // pred_region
          %s178 = ssub.s32 2048, 2048
          %179 = vsyncadd [#allocation6], %s178
          %s180 = sshll.u32 [#allocation5], 4
          %s181 = int_to_ptr.vmem [resolvable:$true] %s180
          %186 = dma.hbm_to_vmem [thread:$0]  %s1, 2048, %s181, [#allocation6], 128, 128, 8
        $region16: #{tpu_custom_call.1} parent=11 // pred_fallthru
          _
        // Predicated region
        $region17: #{tpu_custom_call.1} parent=11 // pred_check
          %p187 = pneg %p103
        $region18: #{tpu_custom_call.1} parent=11 // pred_check_branch
          %189 = sbr.rel (%p187) target = $region20
        $region19: #{tpu_custom_call.1} parent=11 // pred_region
          _
        $region20: #{tpu_custom_call.1} parent=11 // pred_fallthru
          _
      $region12: #{tpu_custom_call.1} parent=5 // pred_fallthru
        _
      %p190 = scmp.lt.s32.totalorder %s21, 2
      // Predicated region
      $region21: #{tpu_custom_call.1} parent=5 // pred_check
        %p191 = pneg %p190
      $region22: #{tpu_custom_call.1} parent=5 // pred_check_branch
        %193 = sbr.rel (%p191) target = $region24
      $region23: #{tpu_custom_call.1} parent=5 // pred_region
        // Predicated region
        $region25: #{tpu_custom_call.1} parent=23 // pred_check
          %p194 = pneg %p55
        $region26: #{tpu_custom_call.1} parent=23 // pred_check_branch
          %196 = sbr.rel (%p194) target = $region28
        $region27: #{tpu_custom_call.1} parent=23 // pred_region
          %s197 = sand.u32 %s45, 1
          %s198 = scalar_lea.sflag [#allocation3], %s197
          %s199 = sand.u32 %s45, 1
          %s200 = smul.addr %s199, 32
          %s201 = scalar_lea.vmem [#allocation2], %s200
          %s202 = smul.u32 4, %s29
          %s204 = ssub.s32 512, 512
          %205 = vsyncadd %s198, %s204
          %s206 = smul.addr %s28, 4
          %s207 = sadd.s32 %s202, %s206
          %s208 = smul.addr %s207, 128
          %s209 = scalar_lea.hbm %s0, %s208
          %s210 = sshll.u32 %s201, 4
          %s211 = int_to_ptr.vmem [resolvable:$true] %s210
          %216 = dma.hbm_to_vmem [thread:$0]  %s209, 512, %s211, %s198, 128, 128, 8
        $region28: #{tpu_custom_call.1} parent=23 // pred_fallthru
          _
      $region24: #{tpu_custom_call.1} parent=5 // pred_fallthru
        _
      %p217 = scmp.le.s32.totalorder 1, %s21
      %p218 = scmp.lt.s32.totalorder %s21, 3
      %p219 = pnand %p217, %p218
      %p220 = pneg %p219
      // Predicated region
      $region29: #{tpu_custom_call.1} parent=5 // pred_check
        _
      $region30: #{tpu_custom_call.1} parent=5 // pred_check_branch
        %222 = sbr.rel (%p219) target = $region32
      $region31: #{tpu_custom_call.1} parent=5 // pred_region
        %s223 = ssub.s32 %s21, 1
        %s224 = sand.u32 %s48, 1
        %s225 = scalar_lea.sflag [#allocation3], %s224
        %s226 = sand.u32 %s48, 1
        %s227 = smul.addr %s226, 32
        %s228 = scalar_lea.vmem [#allocation2], %s227
        // Predicated region
        $region33: #{tpu_custom_call.1} parent=31 // pred_check
          %p229 = pneg %p61
        $region34: #{tpu_custom_call.1} parent=31 // pred_check_branch
          %231 = sbr.rel (%p229) target = $region36
        $region35: #{tpu_custom_call.1} parent=31 // pred_region
          %232 = dma.done %s225, 512
        $region36: #{tpu_custom_call.1} parent=31 // pred_fallthru
          _
        // Predicated region
        $region37: #{tpu_custom_call.1} parent=31 // pred_check
          %p233 = pneg %p82
        $region38: #{tpu_custom_call.1} parent=31 // pred_check_branch
          %235 = sbr.rel (%p233) target = $region40
        $region39: #{tpu_custom_call.1} parent=31 // pred_region
          %236 = dma.done [#allocation6], 2048
        $region40: #{tpu_custom_call.1} parent=31 // pred_fallthru
          _
        %s237 = sand.u32 %s48, 1
        %s238 = scalar_lea.sflag [#allocation3], %s237
        %s239 = sand.u32 %s48, 1
        %s240 = smul.addr %s239, 32
        %s241 = scalar_lea.vmem [#allocation2], %s240
        %p242 = pneg %p61
        %p243 = pneg %p58
        %p244 = pneg %p82
        %p245 = pneg %p79
        %p246 = pneg %p103
        %p247 = pneg %p100
        %p248 = pneg %p131
        %p249 = pneg %p128
        %s250 = sand.u32 %s118, 1
        %s251 = scalar_lea.sflag [#allocation4], %s250
        %s252 = sand.u32 %s118, 1
        %s253 = smul.addr %s252, 32
        %s254 = scalar_lea.vmem [#allocation7], %s253
        %p255 = pneg %p159
        %p256 = pneg %p156
        %s257 = sand.u32 %s146, 1
        %s258 = scalar_lea.sflag [#allocation9], %s257
        %s259 = sand.u32 %s146, 1
        %s260 = smul.addr %s259, 32
        %s261 = scalar_lea.vmem [#allocation8], %s260
        %s262 = smul.u32 4, %s31
        %s263 = smul.u32 4, %s31
        %s264 = smul.u32 4, %s31
        %v265 = vld [vmem:[%s228] sm:$0xff]
        %v266 = vld [vmem:[%s228 + $0x8] sm:$0xff]
        %v267 = vld [vmem:[%s228 + $0x10] sm:$0xff]
        %v268 = vld [vmem:[%s228 + $0x18] sm:$0xff]
        %vm273 = vcmask 1040384
        %v274 = vrot.slane %v265, 7
        %v275 = vrot.slane %v266, 7
        %v276 = vsel %vm273, %v274, %v275
        %v277 = vrot.slane %v267, 7
        %v278 = vsel %vm273, %v275, %v277
        %v279 = vrot.slane %v268, 7
        %v280 = vsel %vm273, %v277, %v279
        %v285 = vsel %vm273, 0.0, %v274
        %vm286 = vcmask 1046528
        %v287 = vrot.slane %v265, 1
        %v288 = vrot.slane %v266, 1
        %v289 = vsel %vm286, %v287, %v288
        %v290 = vrot.slane %v267, 1
        %v291 = vsel %vm286, %v288, %v290
        %v292 = vrot.slane %v268, 1
        %v293 = vsel %vm286, %v290, %v292
        %v298 = vsel %vm286, %v292, 0.0
        %v299 = vlaneseq
        %v300 = vshrl.u32 %v299, 7
        %v301 = vadd.s32 %v300, 8
        %v302 = vadd.s32 %v300, 16
        %v303 = vadd.s32 %v300, 24
        %vm304 = vcmp.lt.s32.totalorder %v300, 0
        %v305 = vsub.s32 0, %v300
        %v306 = vsel %vm304, %v305, %v300
        %v307 = vshrl.u32 %v306, 3
        %v308 = vand.u32 %v306, 7
        %v309 = vsub.s32 0, %v308
        %v310 = vsel %vm304, %v309, %v308
        %vm311 = vcmp.lt.s32.totalorder %v301, 0
        %v312 = vsub.s32 0, %v301
        %v313 = vsel %vm311, %v312, %v301
        %v314 = vshrl.u32 %v313, 3
        %v315 = vand.u32 %v313, 7
        %v316 = vsub.s32 0, %v315
        %v317 = vsel %vm311, %v316, %v315
        %vm318 = vcmp.lt.s32.totalorder %v302, 0
        %v319 = vsub.s32 0, %v302
        %v320 = vsel %vm318, %v319, %v302
        %v321 = vshrl.u32 %v320, 3
        %v322 = vand.u32 %v320, 7
        %v323 = vsub.s32 0, %v322
        %v324 = vsel %vm318, %v323, %v322
        %vm325 = vcmp.lt.s32.totalorder %v303, 0
        %v326 = vsub.s32 0, %v303
        %v327 = vsel %vm325, %v326, %v303
        %v328 = vshrl.u32 %v327, 3
        %v329 = vand.u32 %v327, 7
        %v330 = vsub.s32 0, %v329
        %v331 = vsel %vm325, %v330, %v329
        %vm332 = vcmp.ne.s32.totalorder %v310, 0
        %vm333 = vcmp.ne.s32.totalorder %v317, 0
        %vm334 = vcmp.ne.s32.totalorder %v324, 0
        %vm335 = vcmp.ne.s32.totalorder %v331, 0
        %vm336 = vcmp.lt.s32.totalorder %v310, 0
        %vm337 = vcmp.lt.s32.totalorder %v317, 0
        %vm338 = vcmp.lt.s32.totalorder %v324, 0
        %vm339 = vcmp.lt.s32.totalorder %v331, 0
        %vm340 = vmand %vm336, %vm332
        %vm341 = vmand %vm337, %vm333
        %vm342 = vmand %vm338, %vm334
        %vm343 = vmand %vm339, %vm335
        %v344 = vadd.s32 %v310, 8
        %v345 = vadd.s32 %v317, 8
        %v346 = vadd.s32 %v324, 8
        %v347 = vadd.s32 %v331, 8
        %v348 = vsel %vm340, %v344, %v310
        %v349 = vsel %vm341, %v345, %v317
        %v350 = vsel %vm342, %v346, %v324
        %v351 = vsel %vm343, %v347, %v331
        %vm352 = vcmp.ne.s32.totalorder %v348, 0
        %vm353 = vcmp.ne.s32.totalorder %v349, 0
        %vm354 = vcmp.ne.s32.totalorder %v350, 0
        %vm355 = vcmp.ne.s32.totalorder %v351, 0
        %v356 = vsel %vm352, 1, 0
        %v357 = vsel %vm353, 1, 0
        %v358 = vsel %vm354, 1, 0
        %v359 = vsel %vm355, 1, 0
        %vm360 = vcmp.eq.s32.totalorder %v356, 1
        %vm361 = vcmp.eq.s32.totalorder %v357, 1
        %vm362 = vcmp.eq.s32.totalorder %v358, 1
        %vm363 = vcmp.eq.s32.totalorder %v359, 1
        %v364 = vsel %vm360, %v285, 0.0
        %v365 = vsel %vm361, %v276, 0.0
        %v366 = vsel %vm362, %v278, 0.0
        %v367 = vsel %vm363, %v280, 0.0
        %vm368 = vcmp.ne.s32.totalorder %v348, 7
        %vm369 = vcmp.ne.s32.totalorder %v349, 7
        %vm370 = vcmp.ne.s32.totalorder %v350, 7
        %vm371 = vcmp.ne.s32.totalorder %v351, 7
        %v372 = vsel %vm368, 1, 0
        %v373 = vsel %vm369, 1, 0
        %v374 = vsel %vm370, 1, 0
        %v375 = vsel %vm371, 1, 0
        %vm376 = vcmp.eq.s32.totalorder %v372, 1
        %vm377 = vcmp.eq.s32.totalorder %v373, 1
        %vm378 = vcmp.eq.s32.totalorder %v374, 1
        %vm379 = vcmp.eq.s32.totalorder %v375, 1
        %v380 = vsel %vm376, %v289, 0.0
        %v381 = vsel %vm377, %v291, 0.0
        %v382 = vsel %vm378, %v293, 0.0
        %v383 = vsel %vm379, %v298, 0.0
        %v384 = vld [vmem:[#allocation5] sm:$0xff]
        %v385 = vld [vmem:[#allocation5 + $0x8] sm:$0xff]
        %v386 = vld [vmem:[#allocation5 + $0x10] sm:$0xff]
        %v387 = vld [vmem:[#allocation5 + $0x18] sm:$0xff]
        %s388 = scalar_lea.vmem [#allocation5], 32
        %v389 = vld [vmem:[%s388] sm:$0xff]
        %v390 = vld [vmem:[%s388 + $0x8] sm:$0xff]
        %v391 = vld [vmem:[%s388 + $0x10] sm:$0xff]
        %v392 = vld [vmem:[%s388 + $0x18] sm:$0xff]
        %s393 = scalar_lea.vmem [#allocation5], 64
        %v394 = vld [vmem:[%s393] sm:$0xff]
        %v395 = vld [vmem:[%s393 + $0x8] sm:$0xff]
        %v396 = vld [vmem:[%s393 + $0x10] sm:$0xff]
        %v397 = vld [vmem:[%s393 + $0x18] sm:$0xff]
        %s398 = scalar_lea.vmem [#allocation5], 96
        %v399 = vld [vmem:[%s398] sm:$0xff]
        %v400 = vld [vmem:[%s398 + $0x8] sm:$0xff]
        %v401 = vld [vmem:[%s398 + $0x10] sm:$0xff]
        %v402 = vld [vmem:[%s398 + $0x18] sm:$0xff]
        %v403 = vld [vmem:[%s2] sm:$0x1]
        %vm404 = vcmask 261120
        %v406 = vsel %vm404, %v364, 0
        %v409 = vsel %vm404, %v365, 0
        %v412 = vsel %vm404, %v366, 0
        %v415 = vsel %vm404, %v367, 0
        %417 = vmatprep.subr.mxu0 0.0
        %418 = vmatpush1.msra.mxu0 %v399
        %419 = vmatprep.subr.mxu0 0.0
        %420 = vmatpush1.msra.mxu0 %v400
        %421 = vmatprep.subr.mxu0 0.0
        %422 = vmatpush1.msra.mxu0 %v401
        %423 = vmatprep.subr.mxu0 0.0
        %424 = vmatpush1.msra.mxu0 %v402
        %425 = vmatprep.subr.mxu0 0.0
        %426 = vmatpush1.msra.mxu0 0.0
        %427 = vmatprep.subr.mxu0 0.0
        %428 = vmatpush1.msra.mxu0 0.0
        %429 = vmatprep.subr.mxu0 0.0
        %430 = vmatpush1.msra.mxu0 0.0
        %431 = vmatprep.subr.mxu0 0.0
        %432 = vmatpush1.msra.mxu0 0.0
        %433 = vmatprep.subr.mxu0 0.0
        %434 = vmatpush1.msra.mxu0 0.0
        %435 = vmatprep.subr.mxu0 0.0
        %436 = vmatpush1.msra.mxu0 0.0
        %437 = vmatprep.subr.mxu0 0.0
        %438 = vmatpush1.msra.mxu0 0.0
        %439 = vmatprep.subr.mxu0 0.0
        %440 = vmatpush1.msra.mxu0 0.0
        %441 = vmatprep.subr.mxu0 0.0
        %442 = vmatpush1.msra.mxu0 0.0
        %443 = vmatprep.subr.mxu0 0.0
        %444 = vmatpush1.msra.mxu0 0.0
        %445 = vmatprep.subr.mxu0 0.0
        %446 = vmatpush1.msra.mxu0 0.0
        %447 = vmatprep.subr.mxu0 0.0
        %448 = vmatpush1.msra.mxu0 0.0
        %449 = vmatprep.subr.mxu0 0.0
        %450 = vmatpush1.msra.mxu0 0.0
        %451 = vmatprep.subr.mxu0 0.0
        %452 = vmatpush1.msra.mxu0 0.0
        %453 = vmatprep.subr.mxu0 0.0
        %454 = vmatpush1.msra.mxu0 0.0
        %455 = vmatprep.subr.mxu0 0.0
        %456 = vmatpush1.msra.mxu0 0.0
        %457 = vmatprep.subr.mxu0 0.0
        %458 = vmatpush1.msra.mxu0 0.0
        %459 = vmatprep.subr.mxu0 0.0
        %460 = vmatpush1.msra.mxu0 0.0
        %461 = vmatprep.subr.mxu0 0.0
        %462 = vmatpush1.msra.mxu0 0.0
        %463 = vmatprep.subr.mxu0 0.0
        %464 = vmatpush1.msra.mxu0 0.0
        %465 = vmatprep.subr.mxu0 0.0
        %466 = vmatpush1.msra.mxu0 0.0
        %467 = vmatprep.subr.mxu0 0.0
        %468 = vmatpush1.msra.mxu0 0.0
        %469 = vmatprep.subr.mxu0 0.0
        %470 = vmatpush1.msra.mxu0 0.0
        %471 = vmatprep.subr.mxu0 0.0
        %472 = vmatpush1.msra.mxu0 0.0
        %473 = vmatprep.subr.mxu0 0.0
        %474 = vmatpush1.msra.mxu0 0.0
        %475 = vmatprep.subr.mxu0 0.0
        %476 = vmatpush1.msra.mxu0 0.0
        %477 = vmatprep.subr.mxu0 0.0
        %478 = vmatpush1.msra.mxu0 0.0
        %479 = vmatprep.subr.mxu0 0.0
        %480 = vmatpush1.msra.mxu0 0.0
        %481 = vmatprep.mubr.f32.mxu0 0.0
        %482 = vmatmul.mubr.f32.gmra.mrb[0].mxu0 %v406
        %v483 = vpop.f32.mrb[0].mxu0
        %v484 = vadd.f32 0.0, %v483
        %v485 = vpop.f32.mrb[0].mxu0
        %486 = vmatprep.mubr.f32.mxu0 0.0
        %487 = vmatmul.mubr.f32.gmra.mrb[0].mxu0 %v409
        %v488 = vpop.f32.mrb[0].mxu0
        %v489 = vadd.f32 0.0, %v488
        %v490 = vpop.f32.mrb[0].mxu0
        %491 = vmatprep.mubr.f32.mxu0 0.0
        %492 = vmatmul.mubr.f32.gmra.mrb[0].mxu0 %v412
        %v493 = vpop.f32.mrb[0].mxu0
        %v494 = vadd.f32 0.0, %v493
        %v495 = vpop.f32.mrb[0].mxu0
        %496 = vmatprep.mubr.f32.mxu0 0.0
        %497 = vmatmul.mubr.f32.gmra.mrb[0].mxu0 %v415
        %v498 = vpop.f32.mrb[0].mxu0
        %v499 = vadd.f32 0.0, %v498
        %v500 = vpop.f32.mrb[0].mxu0
        %501 = vdwg.mxu0
        %v502 = vsel %vm404, %v265, 0
        %v504 = vsel %vm404, %v266, 0
        %v506 = vsel %vm404, %v267, 0
        %v508 = vsel %vm404, %v268, 0
        %510 = vmatprep.subr.mxu0 0.0
        %511 = vmatpush1.msra.mxu0 %v389
        %512 = vmatprep.subr.mxu0 0.0
        %513 = vmatpush1.msra.mxu0 %v390
        %514 = vmatprep.subr.mxu0 0.0
        %515 = vmatpush1.msra.mxu0 %v391
        %516 = vmatprep.subr.mxu0 0.0
        %517 = vmatpush1.msra.mxu0 %v392
        %518 = vmatprep.subr.mxu0 0.0
        %519 = vmatpush1.msra.mxu0 0.0
        %520 = vmatprep.subr.mxu0 0.0
        %521 = vmatpush1.msra.mxu0 0.0
        %522 = vmatprep.subr.mxu0 0.0
        %523 = vmatpush1.msra.mxu0 0.0
        %524 = vmatprep.subr.mxu0 0.0
        %525 = vmatpush1.msra.mxu0 0.0
        %526 = vmatprep.subr.mxu0 0.0
        %527 = vmatpush1.msra.mxu0 0.0
        %528 = vmatprep.subr.mxu0 0.0
        %529 = vmatpush1.msra.mxu0 0.0
        %530 = vmatprep.subr.mxu0 0.0
        %531 = vmatpush1.msra.mxu0 0.0
        %532 = vmatprep.subr.mxu0 0.0
        %533 = vmatpush1.msra.mxu0 0.0
        %534 = vmatprep.subr.mxu0 0.0
        %535 = vmatpush1.msra.mxu0 0.0
        %536 = vmatprep.subr.mxu0 0.0
        %537 = vmatpush1.msra.mxu0 0.0
        %538 = vmatprep.subr.mxu0 0.0
        %539 = vmatpush1.msra.mxu0 0.0
        %540 = vmatprep.subr.mxu0 0.0
        %541 = vmatpush1.msra.mxu0 0.0
        %542 = vmatprep.subr.mxu0 0.0
        %543 = vmatpush1.msra.mxu0 0.0
        %544 = vmatprep.subr.mxu0 0.0
        %545 = vmatpush1.msra.mxu0 0.0
        %546 = vmatprep.subr.mxu0 0.0
        %547 = vmatpush1.msra.mxu0 0.0
        %548 = vmatprep.subr.mxu0 0.0
        %549 = vmatpush1.msra.mxu0 0.0
        %550 = vmatprep.subr.mxu0 0.0
        %551 = vmatpush1.msra.mxu0 0.0
        %552 = vmatprep.subr.mxu0 0.0
        %553 = vmatpush1.msra.mxu0 0.0
        %554 = vmatprep.subr.mxu0 0.0
        %555 = vmatpush1.msra.mxu0 0.0
        %556 = vmatprep.subr.mxu0 0.0
        %557 = vmatpush1.msra.mxu0 0.0
        %558 = vmatprep.subr.mxu0 0.0
        %559 = vmatpush1.msra.mxu0 0.0
        %560 = vmatprep.subr.mxu0 0.0
        %561 = vmatpush1.msra.mxu0 0.0
        %562 = vmatprep.subr.mxu0 0.0
        %563 = vmatpush1.msra.mxu0 0.0
        %564 = vmatprep.subr.mxu0 0.0
        %565 = vmatpush1.msra.mxu0 0.0
        %566 = vmatprep.subr.mxu0 0.0
        %567 = vmatpush1.msra.mxu0 0.0
        %568 = vmatprep.subr.mxu0 0.0
        %569 = vmatpush1.msra.mxu0 0.0
        %570 = vmatprep.subr.mxu0 0.0
        %571 = vmatpush1.msra.mxu0 0.0
        %572 = vmatprep.subr.mxu0 0.0
        %573 = vmatpush1.msra.mxu0 0.0
        %574 = vmatprep.mubr.f32.mxu0 0.0
        %575 = vmatmul.mubr.f32.gmra.mrb[0].mxu0 %v502
        %v576 = vpop.f32.mrb[0].mxu0
        %v577 = vadd.f32 %v484, %v576
        %v578 = vpop.f32.mrb[0].mxu0
        %579 = vmatprep.mubr.f32.mxu0 0.0
        %580 = vmatmul.mubr.f32.gmra.mrb[0].mxu0 %v504
        %v581 = vpop.f32.mrb[0].mxu0
        %v582 = vadd.f32 %v489, %v581
        %v583 = vpop.f32.mrb[0].mxu0
        %584 = vmatprep.mubr.f32.mxu0 0.0
        %585 = vmatmul.mubr.f32.gmra.mrb[0].mxu0 %v506
        %v586 = vpop.f32.mrb[0].mxu0
        %v587 = vadd.f32 %v494, %v586
        %v588 = vpop.f32.mrb[0].mxu0
        %589 = vmatprep.mubr.f32.mxu0 0.0
        %590 = vmatmul.mubr.f32.gmra.mrb[0].mxu0 %v508
        %v591 = vpop.f32.mrb[0].mxu0
        %v592 = vadd.f32 %v499, %v591
        %v593 = vpop.f32.mrb[0].mxu0
        %594 = vdwg.mxu0
        %v596 = vlaneseq
        %v597 = vshrl.u32 %v596, 7
        %v598 = vsub.s32 0, %v597
        %v599 = vrot.slane %v403, %v598
        %v601 = vadd.f32 %v577, %v599
        %v602 = vadd.f32 %v582, %v599
        %v603 = vadd.f32 %v587, %v599
        %v604 = vadd.f32 %v592, %v599
        %605 = vmatprep.subr.mxu0 0.0
        %606 = vmatpush1.msra.mxu0 %v394
        %607 = vmatprep.subr.mxu0 0.0
        %608 = vmatpush1.msra.mxu0 %v395
        %609 = vmatprep.subr.mxu0 0.0
        %610 = vmatpush1.msra.mxu0 %v396
        %611 = vmatprep.subr.mxu0 0.0
        %612 = vmatpush1.msra.mxu0 %v397
        %613 = vmatprep.subr.mxu0 0.0
        %614 = vmatpush1.msra.mxu0 0.0
        %615 = vmatprep.subr.mxu0 0.0
        %616 = vmatpush1.msra.mxu0 0.0
        %617 = vmatprep.subr.mxu0 0.0
        %618 = vmatpush1.msra.mxu0 0.0
        %619 = vmatprep.subr.mxu0 0.0
        %620 = vmatpush1.msra.mxu0 0.0
        %621 = vmatprep.subr.mxu0 0.0
        %622 = vmatpush1.msra.mxu0 0.0
        %623 = vmatprep.subr.mxu0 0.0
        %624 = vmatpush1.msra.mxu0 0.0
        %625 = vmatprep.subr.mxu0 0.0
        %626 = vmatpush1.msra.mxu0 0.0
        %627 = vmatprep.subr.mxu0 0.0
        %628 = vmatpush1.msra.mxu0 0.0
        %629 = vmatprep.subr.mxu0 0.0
        %630 = vmatpush1.msra.mxu0 0.0
        %631 = vmatprep.subr.mxu0 0.0
        %632 = vmatpush1.msra.mxu0 0.0
        %633 = vmatprep.subr.mxu0 0.0
        %634 = vmatpush1.msra.mxu0 0.0
        %635 = vmatprep.subr.mxu0 0.0
        %636 = vmatpush1.msra.mxu0 0.0
        %637 = vmatprep.subr.mxu0 0.0
        %638 = vmatpush1.msra.mxu0 0.0
        %639 = vmatprep.subr.mxu0 0.0
        %640 = vmatpush1.msra.mxu0 0.0
        %641 = vmatprep.subr.mxu0 0.0
        %642 = vmatpush1.msra.mxu0 0.0
        %643 = vmatprep.subr.mxu0 0.0
        %644 = vmatpush1.msra.mxu0 0.0
        %645 = vmatprep.subr.mxu0 0.0
        %646 = vmatpush1.msra.mxu0 0.0
        %647 = vmatprep.subr.mxu0 0.0
        %648 = vmatpush1.msra.mxu0 0.0
        %649 = vmatprep.subr.mxu0 0.0
        %650 = vmatpush1.msra.mxu0 0.0
        %651 = vmatprep.subr.mxu0 0.0
        %652 = vmatpush1.msra.mxu0 0.0
        %653 = vmatprep.subr.mxu0 0.0
        %654 = vmatpush1.msra.mxu0 0.0
        %655 = vmatprep.subr.mxu0 0.0
        %656 = vmatpush1.msra.mxu0 0.0
        %657 = vmatprep.subr.mxu0 0.0
        %658 = vmatpush1.msra.mxu0 0.0
        %659 = vmatprep.subr.mxu0 0.0
        %660 = vmatpush1.msra.mxu0 0.0
        %661 = vmatprep.subr.mxu0 0.0
        %662 = vmatpush1.msra.mxu0 0.0
        %663 = vmatprep.subr.mxu0 0.0
        %664 = vmatpush1.msra.mxu0 0.0
        %665 = vmatprep.subr.mxu0 0.0
        %666 = vmatpush1.msra.mxu0 0.0
        %667 = vmatprep.subr.mxu0 0.0
        %668 = vmatpush1.msra.mxu0 0.0
        %669 = vmatprep.mubr.f32.mxu0 0.0
        %670 = vmatmul.mubr.f32.gmra.mrb[0].mxu0 %v502
        %v671 = vpop.f32.mrb[0].mxu0
        %v672 = vadd.f32 0.0, %v671
        %v673 = vpop.f32.mrb[0].mxu0
        %674 = vmatprep.mubr.f32.mxu0 0.0
        %675 = vmatmul.mubr.f32.gmra.mrb[0].mxu0 %v504
        %v676 = vpop.f32.mrb[0].mxu0
        %v677 = vadd.f32 0.0, %v676
        %v678 = vpop.f32.mrb[0].mxu0
        %679 = vmatprep.mubr.f32.mxu0 0.0
        %680 = vmatmul.mubr.f32.gmra.mrb[0].mxu0 %v506
        %v681 = vpop.f32.mrb[0].mxu0
        %v682 = vadd.f32 0.0, %v681
        %v683 = vpop.f32.mrb[0].mxu0
        %684 = vmatprep.mubr.f32.mxu0 0.0
        %685 = vmatmul.mubr.f32.gmra.mrb[0].mxu0 %v508
        %v686 = vpop.f32.mrb[0].mxu0
        %v687 = vadd.f32 0.0, %v686
        %v688 = vpop.f32.mrb[0].mxu0
        %689 = vdwg.mxu0
        %v691 = vsel %vm404, %v380, 0
        %v694 = vsel %vm404, %v381, 0
        %v697 = vsel %vm404, %v382, 0
        %v700 = vsel %vm404, %v383, 0
        %702 = vmatprep.subr.mxu0 0.0
        %703 = vmatpush1.msra.mxu0 %v384
        %704 = vmatprep.subr.mxu0 0.0
        %705 = vmatpush1.msra.mxu0 %v385
        %706 = vmatprep.subr.mxu0 0.0
        %707 = vmatpush1.msra.mxu0 %v386
        %708 = vmatprep.subr.mxu0 0.0
        %709 = vmatpush1.msra.mxu0 %v387
        %710 = vmatprep.subr.mxu0 0.0
        %711 = vmatpush1.msra.mxu0 0.0
        %712 = vmatprep.subr.mxu0 0.0
        %713 = vmatpush1.msra.mxu0 0.0
        %714 = vmatprep.subr.mxu0 0.0
        %715 = vmatpush1.msra.mxu0 0.0
        %716 = vmatprep.subr.mxu0 0.0
        %717 = vmatpush1.msra.mxu0 0.0
        %718 = vmatprep.subr.mxu0 0.0
        %719 = vmatpush1.msra.mxu0 0.0
        %720 = vmatprep.subr.mxu0 0.0
        %721 = vmatpush1.msra.mxu0 0.0
        %722 = vmatprep.subr.mxu0 0.0
        %723 = vmatpush1.msra.mxu0 0.0
        %724 = vmatprep.subr.mxu0 0.0
        %725 = vmatpush1.msra.mxu0 0.0
        %726 = vmatprep.subr.mxu0 0.0
        %727 = vmatpush1.msra.mxu0 0.0
        %728 = vmatprep.subr.mxu0 0.0
        %729 = vmatpush1.msra.mxu0 0.0
        %730 = vmatprep.subr.mxu0 0.0
        %731 = vmatpush1.msra.mxu0 0.0
        %732 = vmatprep.subr.mxu0 0.0
        %733 = vmatpush1.msra.mxu0 0.0
        %734 = vmatprep.subr.mxu0 0.0
        %735 = vmatpush1.msra.mxu0 0.0
        %736 = vmatprep.subr.mxu0 0.0
        %737 = vmatpush1.msra.mxu0 0.0
        %738 = vmatprep.subr.mxu0 0.0
        %739 = vmatpush1.msra.mxu0 0.0
        %740 = vmatprep.subr.mxu0 0.0
        %741 = vmatpush1.msra.mxu0 0.0
        %742 = vmatprep.subr.mxu0 0.0
        %743 = vmatpush1.msra.mxu0 0.0
        %744 = vmatprep.subr.mxu0 0.0
        %745 = vmatpush1.msra.mxu0 0.0
        %746 = vmatprep.subr.mxu0 0.0
        %747 = vmatpush1.msra.mxu0 0.0
        %748 = vmatprep.subr.mxu0 0.0
        %749 = vmatpush1.msra.mxu0 0.0
        %750 = vmatprep.subr.mxu0 0.0
        %751 = vmatpush1.msra.mxu0 0.0
        %752 = vmatprep.subr.mxu0 0.0
        %753 = vmatpush1.msra.mxu0 0.0
        %754 = vmatprep.subr.mxu0 0.0
        %755 = vmatpush1.msra.mxu0 0.0
        %756 = vmatprep.subr.mxu0 0.0
        %757 = vmatpush1.msra.mxu0 0.0
        %758 = vmatprep.subr.mxu0 0.0
        %759 = vmatpush1.msra.mxu0 0.0
        %760 = vmatprep.subr.mxu0 0.0
        %761 = vmatpush1.msra.mxu0 0.0
        %762 = vmatprep.subr.mxu0 0.0
        %763 = vmatpush1.msra.mxu0 0.0
        %764 = vmatprep.subr.mxu0 0.0
        %765 = vmatpush1.msra.mxu0 0.0
        %766 = vmatprep.mubr.f32.mxu0 0.0
        %767 = vmatmul.mubr.f32.gmra.mrb[0].mxu0 %v691
        %v768 = vpop.f32.mrb[0].mxu0
        %v769 = vadd.f32 %v672, %v768
        %v770 = vpop.f32.mrb[0].mxu0
        %771 = vmatprep.mubr.f32.mxu0 0.0
        %772 = vmatmul.mubr.f32.gmra.mrb[0].mxu0 %v694
        %v773 = vpop.f32.mrb[0].mxu0
        %v774 = vadd.f32 %v677, %v773
        %v775 = vpop.f32.mrb[0].mxu0
        %776 = vmatprep.mubr.f32.mxu0 0.0
        %777 = vmatmul.mubr.f32.gmra.mrb[0].mxu0 %v697
        %v778 = vpop.f32.mrb[0].mxu0
        %v779 = vadd.f32 %v682, %v778
        %v780 = vpop.f32.mrb[0].mxu0
        %781 = vmatprep.mubr.f32.mxu0 0.0
        %782 = vmatmul.mubr.f32.gmra.mrb[0].mxu0 %v700
        %v783 = vpop.f32.mrb[0].mxu0
        %v784 = vadd.f32 %v687, %v783
        %v785 = vpop.f32.mrb[0].mxu0
        %786 = vdwg.mxu0
        %v787 = vadd.f32 %v769, %v599
        %v788 = vadd.f32 %v774, %v599
        %v789 = vadd.f32 %v779, %v599
        %v790 = vadd.f32 %v784, %v599
        %vm791 = vcmp.ge.f32.partialorder %v601, 0.0
        %vm792 = vcmp.ge.f32.partialorder %v602, 0.0
        %vm793 = vcmp.ge.f32.partialorder %v603, 0.0
        %vm794 = vcmp.ge.f32.partialorder %v604, 0.0
        %v795 = vmul.f32 %v601, 0.2
        %v796 = vmul.f32 %v602, 0.2
        %v797 = vmul.f32 %v603, 0.2
        %v798 = vmul.f32 %v604, 0.2
        %v799 = vsel %vm791, %v601, %v795
        %v800 = vsel %vm792, %v602, %v796
        %v801 = vsel %vm793, %v603, %v797
        %v802 = vsel %vm794, %v604, %v798
        %vm803 = vcmask 523264
        %804 = vst.msk [vmem:[%s254] sm:$0xff] %vm803, %v799
        %805 = vst.msk [vmem:[%s254 + $0x8] sm:$0xff] %vm803, %v800
        %806 = vst.msk [vmem:[%s254 + $0x10] sm:$0xff] %vm803, %v801
        %807 = vst.msk [vmem:[%s254 + $0x18] sm:$0xff] %vm803, %v802
        %vm808 = vcmp.ge.f32.partialorder %v787, 0.0
        %vm809 = vcmp.ge.f32.partialorder %v788, 0.0
        %vm810 = vcmp.ge.f32.partialorder %v789, 0.0
        %vm811 = vcmp.ge.f32.partialorder %v790, 0.0
        %v812 = vmul.f32 %v787, 0.2
        %v813 = vmul.f32 %v788, 0.2
        %v814 = vmul.f32 %v789, 0.2
        %v815 = vmul.f32 %v790, 0.2
        %v816 = vsel %vm808, %v787, %v812
        %v817 = vsel %vm809, %v788, %v813
        %v818 = vsel %vm810, %v789, %v814
        %v819 = vsel %vm811, %v790, %v815
        %820 = vst.msk [vmem:[%s261] sm:$0xff] %vm803, %v816
        %821 = vst.msk [vmem:[%s261 + $0x8] sm:$0xff] %vm803, %v817
        %822 = vst.msk [vmem:[%s261 + $0x10] sm:$0xff] %vm803, %v818
        %823 = vst.msk [vmem:[%s261 + $0x18] sm:$0xff] %vm803, %v819
        %s824 = sand.u32 %s118, 1
        %s825 = scalar_lea.sflag [#allocation4], %s824
        %s826 = sand.u32 %s118, 1
        %s827 = smul.addr %s826, 32
        %s828 = scalar_lea.vmem [#allocation7], %s827
        %s829 = sand.u32 %s146, 1
        %s830 = scalar_lea.sflag [#allocation9], %s829
        %s831 = sand.u32 %s146, 1
        %s832 = smul.addr %s831, 32
        %s833 = scalar_lea.vmem [#allocation8], %s832
        // Predicated region
        $region41: #{tpu_custom_call.1} parent=31 // pred_check
          %p834 = pneg %p128
        $region42: #{tpu_custom_call.1} parent=31 // pred_check_branch
          %836 = sbr.rel (%p834) target = $region44
        $region43: #{tpu_custom_call.1} parent=31 // pred_region
          %s837 = smul.u32 4, %s31
          %s839 = ssub.s32 512, 512
          %840 = vsyncadd %s825, %s839
          %s841 = smul.addr %s30, 4
          %s842 = sadd.s32 %s837, %s841
          %s843 = smul.addr %s842, 128
          %s844 = scalar_lea.hbm %s3, %s843
          %s845 = sshll.u32 %s828, 4
          %s846 = int_to_ptr.vmem [resolvable:$true] %s845
          %851 = dma.vmem_to_hbm [thread:$0]  %s846, 512, %s844, %s825, 128, 128, 8
        $region44: #{tpu_custom_call.1} parent=31 // pred_fallthru
          _
        // Predicated region
        $region45: #{tpu_custom_call.1} parent=31 // pred_check
          %p852 = pneg %p156
        $region46: #{tpu_custom_call.1} parent=31 // pred_check_branch
          %854 = sbr.rel (%p852) target = $region48
        $region47: #{tpu_custom_call.1} parent=31 // pred_region
          %s855 = smul.u32 4, %s31
          %s857 = ssub.s32 512, 512
          %858 = vsyncadd %s830, %s857
          %s859 = smul.addr %s30, 4
          %s860 = sadd.s32 %s855, %s859
          %s861 = smul.addr %s860, 128
          %s862 = scalar_lea.hbm %s4, %s861
          %s863 = sshll.u32 %s833, 4
          %s864 = int_to_ptr.vmem [resolvable:$true] %s863
          %869 = dma.vmem_to_hbm [thread:$0]  %s864, 512, %s862, %s830, 128, 128, 8
        $region48: #{tpu_custom_call.1} parent=31 // pred_fallthru
          _
      $region32: #{tpu_custom_call.1} parent=5 // pred_fallthru
        _
      %p870 = scmp.le.s32.totalorder 2, %s21
      // Predicated region
      $region49: #{tpu_custom_call.1} parent=5 // pred_check
        %p871 = pneg %p870
      $region50: #{tpu_custom_call.1} parent=5 // pred_check_branch
        %873 = sbr.rel (%p871) target = $region52
      $region51: #{tpu_custom_call.1} parent=5 // pred_region
        %s874 = ssub.s32 %s21, 2
        // Predicated region
        $region53: #{tpu_custom_call.1} parent=51 // pred_check
          %p875 = pneg %p134
        $region54: #{tpu_custom_call.1} parent=51 // pred_check_branch
          %877 = sbr.rel (%p875) target = $region56
        $region55: #{tpu_custom_call.1} parent=51 // pred_region
          %s878 = sand.u32 %s119, 1
          %s879 = scalar_lea.sflag [#allocation4], %s878
          %s880 = sand.u32 %s119, 1
          %s881 = smul.addr %s880, 32
          %s882 = scalar_lea.vmem [#allocation7], %s881
          %883 = dma.done %s879, 512
        $region56: #{tpu_custom_call.1} parent=51 // pred_fallthru
          _
        // Predicated region
        $region57: #{tpu_custom_call.1} parent=51 // pred_check
          %p884 = pneg %p162
        $region58: #{tpu_custom_call.1} parent=51 // pred_check_branch
          %886 = sbr.rel (%p884) target = $region60
        $region59: #{tpu_custom_call.1} parent=51 // pred_region
          %s887 = sand.u32 %s147, 1
          %s888 = scalar_lea.sflag [#allocation9], %s887
          %s889 = sand.u32 %s147, 1
          %s890 = smul.addr %s889, 32
          %s891 = scalar_lea.vmem [#allocation8], %s890
          %892 = dma.done %s888, 512
        $region60: #{tpu_custom_call.1} parent=51 // pred_fallthru
          _
      $region52: #{tpu_custom_call.1} parent=5 // pred_fallthru
        _
    $region6: #{tpu_custom_call.1} parent=1 // loop_footer
      %s25 = sadd.s32 1, %s21
    $region7: #{tpu_custom_call.1} parent=1 // loop_footer_branch
      %20 = sbr.rel target = $region3
    $region8: #{tpu_custom_call.1} parent=1 // loop_exit
      _
    %893 = vsyncpa [#allocation3], 1
    %s894 = scalar_lea.sflag [#allocation3], 1
    %895 = vsyncpa %s894, 1
    %896 = vsyncpa [#allocation6], 1
    %897 = vsyncpa [#allocation4], 1
    %s898 = scalar_lea.sflag [#allocation4], 1
    %899 = vsyncpa %s898, 1
    %900 = vsyncpa [#allocation9], 1
    %s901 = scalar_lea.sflag [#allocation9], 1
    %902 = vsyncpa %s901, 1

</llo_original>
